<compile_context>
chip_gen: v6e
topology: v6e:2x2x1
jax: 0.10.0
libtpu: 0.0.40
codegen_flags: <defaults>
</compile_context>

<pallas_src>
import jax
import jax.numpy as jnp
from jax.experimental import pallas as pl
from jax.experimental.pallas import tpu as pltpu


def _cdiv(a, b):
    return -(-a // b)


def _vmem_budget():
    """Returns (block-sizing budget, scoped vmem limit) in bytes."""
    try:
        cap = int(pltpu.get_tpu_info().vmem_capacity_bytes)
    except Exception:
        cap = 64 * 1024 * 1024  # conservative (v7x-like) fallback
    budget = max(8 * 1024 * 1024, min(cap // 2, 80 * 1024 * 1024))
    limit = max(32 * 1024 * 1024, min((cap * 3) // 4, 100 * 1024 * 1024))
    return budget, limit


def copydetect_collate(imgs, ids, mean, std, *, n_crops, key):
    """imgs: (B, C, H, W) float32, ids: (B,) int32, mean/std: (C,) float32."""
    B, C, H, W = imgs.shape
    hw = H * W
    R = _cdiv(hw, 128)          # lane-dense rows per channel
    hw_pad = R * 128
    total = n_crops * B

    # --- lane-dense layout: (B, C, R, 128); per-channel tail zero-padded ----
    x3 = imgs.astype(jnp.float32).reshape(B, C, hw)
    if hw_pad != hw:
        x3 = jnp.pad(x3, ((0, 0), (0, 0), (0, hw_pad - hw)))
    x4 = x3.reshape(B, C, R, 128)

    # Fold normalize into affine x*scale + bias; constants live in SMEM.
    scale = (1.0 / std).astype(jnp.float32)
    bias = (-mean / std).astype(jnp.float32)

    # --- random augmentation source indices (matches the np.random logic) ---
    k1, k2 = jax.random.split(key)
    rand_bool = jax.random.uniform(k1, (n_crops, B)) < 0.5
    rand_idx = jax.random.randint(k2, (n_crops, B), 0, B)
    idx = jnp.arange(B, dtype=jnp.int32)[None, :]
    aug_indices = jnp.where(rand_bool, idx, rand_idx).astype(jnp.int32).reshape(total)

    img_bytes = C * hw_pad * 4
    budget, vmem_limit = _vmem_budget()
    smem_spec = pl.BlockSpec(memory_space=pltpu.MemorySpace.SMEM)

    # ===== reference path: read each image once, write n_crops replicas =====
    # live VMEM per image ~= 2x (double-buffered) input block + 2x output block
    ips = max(1, min(B, budget // (4 * img_bytes)))
    n_i = _cdiv(B, ips)
    B_pad = n_i * ips
    x_ref_in = x4 if B_pad == B else jnp.pad(
        x4, ((0, B_pad - B), (0, 0), (0, 0), (0, 0)))

    def _ref_kernel(img_ref, scale_ref, bias_ref, out_ref):
        # img_ref/out_ref: (ips, C, R, 128); scale/bias: (C,) f32 in SMEM.
        for c in range(C):                      # static, small
            out_ref[:, c] = img_ref[:, c] * scale_ref[c] + bias_ref[c]

    ref_out = pl.pallas_call(
        _ref_kernel,
        out_shape=jax.ShapeDtypeStruct((n_crops * B_pad, C, R, 128), jnp.float32),
        grid_spec=pltpu.PrefetchScalarGridSpec(
            num_scalar_prefetch=0,
            grid=(n_i, n_crops),                # crop axis inner -> input reused
            in_specs=[
                pl.BlockSpec((ips, C, R, 128), lambda i, k: (i, 0, 0, 0)),
                smem_spec,
                smem_spec,
            ],
            out_specs=pl.BlockSpec(
                (ips, C, R, 128), lambda i, k: (k * n_i + i, 0, 0, 0)),
        ),
        compiler_params=pltpu.CompilerParams(
            dimension_semantics=("parallel", "parallel"),
            vmem_limit_bytes=vmem_limit,
        ),
    )(x_ref_in, scale, bias)
    ref_imgs = (
        ref_out.reshape(n_crops, B_pad, C, hw_pad)[:, :B, :, :hw]
        .reshape(total, C, H, W)
    )

    # ===== augmented path: batched manual-DMA gather + jitter + normalize ===
    # live VMEM ~= G-image gather scratch + 2x (double-buffered) output block
    G = max(1, min(16, total, budget // (3 * img_bytes)))
    n_steps = _cdiv(total, G)
    total_pad = n_steps * G
    aug_idx_pad = aug_indices if total_pad == total else jnp.pad(
        aug_indices, (0, total_pad - total))

    def _aug_kernel(aug_idx_ref, imgs_hbm, scale_ref, bias_ref, out_ref, buf, sems):
        step = pl.program_id(0)
        base = step * G
        # Issue all G gathers, then wait; the output DMA of the previous grid
        # step overlaps with these reads (body is self-contained per step, so
        # megacore sharding of the grid stays safe).
        for g in range(G):                      # static, small
            pltpu.make_async_copy(
                imgs_hbm.at[aug_idx_ref[base + g]], buf.at[g], sems.at[g]
            ).start()
        for g in range(G):
            pltpu.make_async_copy(imgs_hbm.at[0], buf.at[g], sems.at[g]).wait()
        for c in range(C):
            xc = jnp.clip(buf[:, c] * 1.2 + 0.1, 0.0, 1.0)
            out_ref[:, c] = xc * scale_ref[c] + bias_ref[c]

    aug_out = pl.pallas_call(
        _aug_kernel,
        out_shape=jax.ShapeDtypeStruct((total_pad, C, R, 128), jnp.float32),
        grid_spec=pltpu.PrefetchScalarGridSpec(
            num_scalar_prefetch=1,
            grid=(n_steps,),
            in_specs=[
                pl.BlockSpec(memory_space=pl.ANY),   # imgs stay in HBM
                smem_spec,
                smem_spec,
            ],
            out_specs=pl.BlockSpec((G, C, R, 128), lambda i, aug_idx: (i, 0, 0, 0)),
            scratch_shapes=[
                pltpu.VMEM((G, C, R, 128), jnp.float32),
                pltpu.SemaphoreType.DMA((G,)),
            ],
        ),
        compiler_params=pltpu.CompilerParams(
            dimension_semantics=("parallel",),
            vmem_limit_bytes=vmem_limit,
        ),
    )(aug_idx_pad, x4, scale, bias)
    aug_imgs = (
        aug_out.reshape(total_pad, C, hw_pad)[:total, :, :hw]
        .reshape(total, C, H, W)
    )

    # --- ids (trivial glue) --------------------------------------------------
    ref_ids = jnp.tile(ids.astype(jnp.int32), n_crops)
    aug_ids = ids.astype(jnp.int32)[aug_indices]
    return ref_imgs, aug_imgs, ref_ids, aug_ids


if __name__ == "__main__":
    B, C, H, W = 2, 4, 16, 16
    n_crops = 2

    key = jax.random.PRNGKey(0)
    k_img, k_idx = jax.random.split(key)
    imgs = jax.random.uniform(k_img, (B, C, H, W), dtype=jnp.float32)
    ids = jnp.arange(100, 100 + B, dtype=jnp.int32)

    # Deterministic "transform" parameters (per-channel normalize constants).
    mean = jnp.array([0.485, 0.456, 0.406, 0.5], dtype=jnp.float32)
    std = jnp.array([0.229, 0.224, 0.225, 0.25], dtype=jnp.float32)

    ref_imgs, aug_imgs, ref_ids, aug_ids = copydetect_collate(
        imgs, ids, mean, std, n_crops=n_crops, key=k_idx
    )
    jax.block_until_ready((ref_imgs, aug_imgs, ref_ids, aug_ids))

    # Pure-JAX reference check for the Pallas paths.
    k1, k2 = jax.random.split(k_idx)
    rb = jax.random.uniform(k1, (n_crops, B)) < 0.5
    ri = jax.random.randint(k2, (n_crops, B), 0, B)
    aug_idx = jnp.where(rb, jnp.arange(B, dtype=jnp.int32)[None, :], ri).reshape(-1)
    mb = mean.reshape(1, C, 1, 1)
    sb = std.reshape(1, C, 1, 1)
    ref_expect = (jnp.tile(imgs, (n_crops, 1, 1, 1)) - mb) / sb
    aug_expect = (jnp.clip(imgs[aug_idx] * 1.2 + 0.1, 0.0, 1.0) - mb) / sb
    assert jnp.allclose(ref_imgs, ref_expect, atol=1e-5)
    assert jnp.allclose(aug_imgs, aug_expect, atol=1e-5)
    assert jnp.array_equal(ref_ids, jnp.tile(ids, n_crops))
    assert jnp.array_equal(aug_ids, ids[aug_idx])
    assert ref_imgs.shape == (n_crops * B, C, H, W)
    assert aug_imgs.shape == (n_crops * B, C, H, W)
    assert ref_ids.shape == (n_crops * B,) and aug_ids.shape == (n_crops * B,)

    print("KERNEL_OK")
</pallas_src>

<mosaic_0001>
module attributes {stable_mosaic.version = 11 : i64} {
  func.func @_ref_kernel(%arg0: i32, %arg1: i32, %arg2: memref<2x4x2x128xf32, #tpu.memory_space<vmem>>, %arg3: memref<4xf32, #tpu.memory_space<smem>>, %arg4: memref<4xf32, #tpu.memory_space<smem>>, %arg5: memref<2x4x2x128xf32, #tpu.memory_space<vmem>>) attributes {dimension_semantics = [#tpu.dimension_semantics<parallel>, #tpu.dimension_semantics<parallel>], iteration_bounds = array<i64: 1, 2>, scalar_prefetch = 0 : i64, scratch_operands = 0 : i64, tpu.core_type = #tpu.core_type<tc>, window_params = [{transform_indices = @transform_0, window_bounds = array<i64: 2, 4, 2, 128>}, {transform_indices = @transform_1, window_bounds = array<i64: 4>}, {transform_indices = @transform_2, window_bounds = array<i64: 4>}, {transform_indices = @transform_3, window_bounds = array<i64: 2, 4, 2, 128>}]} {
    %c0 = arith.constant 0 : index
    %c0_0 = arith.constant 0 : index
    %c0_1 = arith.constant 0 : index
    %c0_2 = arith.constant 0 : index
    %0 = vector.load %arg2[%c0, %c0_0, %c0_1, %c0_2] : memref<2x4x2x128xf32, #tpu.memory_space<vmem>>, vector<2x1x2x128xf32>
    %1 = vector.shape_cast %0 : vector<2x1x2x128xf32> to vector<2x2x128xf32>
    %c0_3 = arith.constant 0 : index
    %2 = memref.load %arg3[%c0_3] : memref<4xf32, #tpu.memory_space<smem>>
    %3 = vector.broadcast %2 : f32 to vector<2x2x128xf32>
    %4 = arith.mulf %1, %3 : vector<2x2x128xf32>
    %c0_4 = arith.constant 0 : index
    %5 = memref.load %arg4[%c0_4] : memref<4xf32, #tpu.memory_space<smem>>
    %6 = vector.broadcast %5 : f32 to vector<2x2x128xf32>
    %7 = arith.addf %4, %6 : vector<2x2x128xf32>
    %c0_5 = arith.constant 0 : index
    %c0_6 = arith.constant 0 : index
    %c0_7 = arith.constant 0 : index
    %c0_8 = arith.constant 0 : index
    %8 = vector.load %arg5[%c0_5, %c0_6, %c0_7, %c0_8] : memref<2x4x2x128xf32, #tpu.memory_space<vmem>>, vector<2x1x2x128xf32>
    %9 = vector.shape_cast %8 : vector<2x1x2x128xf32> to vector<2x2x128xf32>
    %10 = vector.shape_cast %7 : vector<2x2x128xf32> to vector<2x1x2x128xf32>
    tpu.vector_store %arg5[%c0_5, %c0_6, %c0_7, %c0_8], %10 {strides = array<i32>} : memref<2x4x2x128xf32, #tpu.memory_space<vmem>>, vector<2x1x2x128xf32>,
    %c0_9 = arith.constant 0 : index
    %c1 = arith.constant 1 : index
    %c0_10 = arith.constant 0 : index
    %c0_11 = arith.constant 0 : index
    %11 = vector.load %arg2[%c0_9, %c1, %c0_10, %c0_11] : memref<2x4x2x128xf32, #tpu.memory_space<vmem>>, vector<2x1x2x128xf32>
    %12 = vector.shape_cast %11 : vector<2x1x2x128xf32> to vector<2x2x128xf32>
    %c1_12 = arith.constant 1 : index
    %13 = memref.load %arg3[%c1_12] : memref<4xf32, #tpu.memory_space<smem>>
    %14 = vector.broadcast %13 : f32 to vector<2x2x128xf32>
    %15 = arith.mulf %12, %14 : vector<2x2x128xf32>
    %c1_13 = arith.constant 1 : index
    %16 = memref.load %arg4[%c1_13] : memref<4xf32, #tpu.memory_space<smem>>
    %17 = vector.broadcast %16 : f32 to vector<2x2x128xf32>
    %18 = arith.addf %15, %17 : vector<2x2x128xf32>
    %c0_14 = arith.constant 0 : index
    %c1_15 = arith.constant 1 : index
    %c0_16 = arith.constant 0 : index
    %c0_17 = arith.constant 0 : index
    %19 = vector.load %arg5[%c0_14, %c1_15, %c0_16, %c0_17] : memref<2x4x2x128xf32, #tpu.memory_space<vmem>>, vector<2x1x2x128xf32>
    %20 = vector.shape_cast %19 : vector<2x1x2x128xf32> to vector<2x2x128xf32>
    %21 = vector.shape_cast %18 : vector<2x2x128xf32> to vector<2x1x2x128xf32>
    tpu.vector_store %arg5[%c0_14, %c1_15, %c0_16, %c0_17], %21 {strides = array<i32>} : memref<2x4x2x128xf32, #tpu.memory_space<vmem>>, vector<2x1x2x128xf32>,
    %c0_18 = arith.constant 0 : index
    %c2 = arith.constant 2 : index
    %c0_19 = arith.constant 0 : index
    %c0_20 = arith.constant 0 : index
    %22 = vector.load %arg2[%c0_18, %c2, %c0_19, %c0_20] : memref<2x4x2x128xf32, #tpu.memory_space<vmem>>, vector<2x1x2x128xf32>
    %23 = vector.shape_cast %22 : vector<2x1x2x128xf32> to vector<2x2x128xf32>
    %c2_21 = arith.constant 2 : index
    %24 = memref.load %arg3[%c2_21] : memref<4xf32, #tpu.memory_space<smem>>
    %25 = vector.broadcast %24 : f32 to vector<2x2x128xf32>
    %26 = arith.mulf %23, %25 : vector<2x2x128xf32>
    %c2_22 = arith.constant 2 : index
    %27 = memref.load %arg4[%c2_22] : memref<4xf32, #tpu.memory_space<smem>>
    %28 = vector.broadcast %27 : f32 to vector<2x2x128xf32>
    %29 = arith.addf %26, %28 : vector<2x2x128xf32>
    %c0_23 = arith.constant 0 : index
    %c2_24 = arith.constant 2 : index
    %c0_25 = arith.constant 0 : index
    %c0_26 = arith.constant 0 : index
    %30 = vector.load %arg5[%c0_23, %c2_24, %c0_25, %c0_26] : memref<2x4x2x128xf32, #tpu.memory_space<vmem>>, vector<2x1x2x128xf32>
    %31 = vector.shape_cast %30 : vector<2x1x2x128xf32> to vector<2x2x128xf32>
    %32 = vector.shape_cast %29 : vector<2x2x128xf32> to vector<2x1x2x128xf32>
    tpu.vector_store %arg5[%c0_23, %c2_24, %c0_25, %c0_26], %32 {strides = array<i32>} : memref<2x4x2x128xf32, #tpu.memory_space<vmem>>, vector<2x1x2x128xf32>,
    %c0_27 = arith.constant 0 : index
    %c3 = arith.constant 3 : index
    %c0_28 = arith.constant 0 : index
    %c0_29 = arith.constant 0 : index
    %33 = vector.load %arg2[%c0_27, %c3, %c0_28, %c0_29] : memref<2x4x2x128xf32, #tpu.memory_space<vmem>>, vector<2x1x2x128xf32>
    %34 = vector.shape_cast %33 : vector<2x1x2x128xf32> to vector<2x2x128xf32>
    %c3_30 = arith.constant 3 : index
    %35 = memref.load %arg3[%c3_30] : memref<4xf32, #tpu.memory_space<smem>>
    %36 = vector.broadcast %35 : f32 to vector<2x2x128xf32>
    %37 = arith.mulf %34, %36 : vector<2x2x128xf32>
    %c3_31 = arith.constant 3 : index
    %38 = memref.load %arg4[%c3_31] : memref<4xf32, #tpu.memory_space<smem>>
    %39 = vector.broadcast %38 : f32 to vector<2x2x128xf32>
    %40 = arith.addf %37, %39 : vector<2x2x128xf32>
    %c0_32 = arith.constant 0 : index
    %c3_33 = arith.constant 3 : index
    %c0_34 = arith.constant 0 : index
    %c0_35 = arith.constant 0 : index
    %41 = vector.load %arg5[%c0_32, %c3_33, %c0_34, %c0_35] : memref<2x4x2x128xf32, #tpu.memory_space<vmem>>, vector<2x1x2x128xf32>
    %42 = vector.shape_cast %41 : vector<2x1x2x128xf32> to vector<2x2x128xf32>
    %43 = vector.shape_cast %40 : vector<2x2x128xf32> to vector<2x1x2x128xf32>
    tpu.vector_store %arg5[%c0_32, %c3_33, %c0_34, %c0_35], %43 {strides = array<i32>} : memref<2x4x2x128xf32, #tpu.memory_space<vmem>>, vector<2x1x2x128xf32>,
    return
  }
  func.func @transform_0(%arg0: i32, %arg1: i32) -> (i32, i32, i32, i32) {
    %c0_i32 = arith.constant 0 : i32
    %c0_i32_0 = arith.constant 0 : i32
    %c0_i32_1 = arith.constant 0 : i32
    %c0_i32_2 = arith.constant 0 : i32
    return %arg0, %c0_i32, %c0_i32_0, %c0_i32_1 : i32, i32, i32, i32
  }
  func.func @transform_1(%arg0: i32, %arg1: i32) -> i32 {
    %c0_i32 = arith.constant 0 : i32
    %c0_i32_0 = arith.constant 0 : i32
    return %c0_i32 : i32
  }
  func.func @transform_2(%arg0: i32, %arg1: i32) -> i32 {
    %c0_i32 = arith.constant 0 : i32
    %c0_i32_0 = arith.constant 0 : i32
    return %c0_i32 : i32
  }
  func.func @transform_3(%arg0: i32, %arg1: i32) -> (i32, i32, i32, i32) {
    %c1_i32 = arith.constant 1 : i32
    %0 = arith.muli %arg1, %c1_i32 : i32
    %1 = arith.addi %0, %arg0 : i32
    %c0_i32 = arith.constant 0 : i32
    %c0_i32_0 = arith.constant 0 : i32
    %c0_i32_1 = arith.constant 0 : i32
    %c0_i32_2 = arith.constant 0 : i32
    return %1, %c0_i32, %c0_i32_0, %c0_i32_1 : i32, i32, i32, i32
  }
}

</mosaic_0001>

<llo_original>
// kernel: tpu_custom_call.1
$region0: #{tpu_custom_call.1}
  #allocation0 [shape = 'u32[]', space=smem, size = 0x4, offset = 0x4, fixed_abs, tag = 'smem constant byte address 0x4 - core index']
  #allocation1 [shape = 'u32[144,128]{1,0:T(1,128)}', space=vmem, size = 0x12000, scoped, tag = 'internal scratch']
  %s0 = inlined_call_operand.hbm [shape: f32[2,4,2,128], index: 0, kind: input, shape index: {}]
  %s1 = inlined_call_operand.vmem [shape: f32[4], index: 1, kind: input, shape index: {}]
  %s2 = inlined_call_operand.vmem [shape: f32[4], index: 2, kind: input, shape index: {}]
  %s3 = inlined_call_operand.hbm [shape: f32[4,4,2,128], index: 3, kind: output, shape index: {}]
  %s4 = sld [smem:[#allocation0]]
  $region57: #{tpu_custom_call.1} parent=0
    _
  %s6 = ssub.s32 1, %s4
  %s7 = scalar_select 0, %s6, %s4
  $region1: #{tpu_custom_call.1} parent=0
    #allocation2 [shape = 'u8[8192]{0}', space=vmem, size = 0x2000, scoped, tag = 'input window, operand 0, single buffered']
    #allocation3 [shape = 's32[2]{0}', space=sflag, size = 0x8, scoped, tag = 'scoped memory for tpu_custom_call.1']
    #allocation4 [shape = 's32[2]{0}', space=sflag, size = 0x8, scoped, tag = 'scoped memory for tpu_custom_call.1']
    #allocation5 [shape = 's32[2]{0}', space=sflag, size = 0x8, scoped, tag = 'scoped memory for tpu_custom_call.1']
    #allocation6 [shape = 'u8[512]{0}', space=smem, size = 0x200, scoped, tag = 'input window, operand 1, single buffered']
    #allocation7 [shape = 'u8[512]{0}', space=smem, size = 0x200, scoped, tag = 'input window, operand 2, single buffered']
    #allocation8 [shape = 's32[1]{0}', space=sflag, size = 0x4, scoped, tag = 'scoped memory for tpu_custom_call.1']
    #allocation9 [shape = 'u8[16384]{0}', space=vmem, size = 0x4000, scoped, tag = 'output window, operand 0']
    %8 = vsyncpa [#allocation3], 0
    %9 = vsyncpa [#allocation5], 0
    %10 = vsyncpa [#allocation8], 0
    %11 = vsyncpa [#allocation4], 0
    %s12 = scalar_lea.sflag [#allocation4], 1
    %13 = vsyncpa %s12, 0
    loop: start=0, step=1, limit=4
    $region2: #{tpu_custom_call.1} parent=1 // loop_pre_header
      _
    $region3: #{tpu_custom_call.1} parent=1 // loop_header
      %s15 = sphi 0, %s19
      %p16 = scmp.ge.s32.totalorder %s15, 4
      %s22 = sphi 0, %s34
      %s23 = sphi 0, %s30
      %s24 = sphi 0, %s22
      %s25 = sphi 0, %s23
      %s26 = sphi 0, %s24
      %s27 = sphi 0, %s25
      %s37 = sphi 0, %s39
      %s40 = sphi 0, %s37
      %s41 = sphi 0, %s40
      %s57 = sphi 0, %s41
      %s61 = sphi 0, %s61
      %s63 = sphi 0, %s61
      %s64 = sphi 0, %s63
      %s78 = sphi 0, %s64
      %s82 = sphi 0, %s82
      %s84 = sphi 0, %s82
      %s85 = sphi 0, %s84
      %s99 = sphi 0, %s85
      %s107 = sphi 0, %s109
      %s110 = sphi 0, %s107
      %s111 = sphi 0, %s110
      %s127 = sphi 0, %s111
    $region4: #{tpu_custom_call.1} parent=1 // loop_header_branch
      %18 = sbr.rel (%p16) target = $region8
    $region5: #{tpu_custom_call.1} parent=1 // loop_body
      %s20 = ssub.s32 %s15, 1
      %s21 = ssub.s32 %s15, 2
      %s28 = sadd.s32 1, %s23
      %p29 = scmp.ge.s32.totalorder %s28, 2
      %s30 = scalar_select %p29, 0, %s28
      %s31 = sadd.s32 1, %s22
      %s32 = scalar_select %p29, %s31, %s22
      %p33 = scmp.ge.s32.totalorder %s32, 1
      %s34 = scalar_select %p33, 0, %s32
      %s35 = ssub.s32 %s22, %s34
      %p36 = scmp.eq.s32.totalorder %s35, 0
      %s38 = sadd.s32 %s37, 1
      %s39 = scalar_select %p36, %s37, %s38
      %p42 = pneg %p36
      %p43 = scmp.eq.s32.totalorder %s15, 1
      %p44 = por %p42, %p43
      %p45 = scmp.ne.s32.totalorder %s37, %s40
      %p46 = scmp.eq.s32.totalorder %s15, 0
      %p47 = por %p45, %p46
      %p48 = scmp.ne.s32.totalorder %s37, %s40
      %p49 = scmp.eq.s32.totalorder %s20, 1
      %p50 = por %p48, %p49
      %p51 = scmp.ne.s32.totalorder %s40, %s41
      %p52 = scmp.eq.s32.totalorder %s20, 0
      %p53 = por %p51, %p52
      %p54 = scmp.ne.s32.totalorder %s40, %s41
      %p55 = scmp.eq.s32.totalorder %s21, 1
      %p56 = por %p54, %p55
      %p58 = scmp.ne.s32.totalorder %s41, %s57
      %p59 = scmp.eq.s32.totalorder %s21, 0
      %p60 = por %p58, %p59
      %s62 = sadd.s32 %s61, 1
      %p65 = scmp.eq.s32.totalorder %s15, 1
      %p66 = scmp.ne.s32.totalorder %s61, %s63
      %p67 = scmp.eq.s32.totalorder %s15, 0
      %p68 = por %p66, %p67
      %p69 = scmp.ne.s32.totalorder %s61, %s63
      %p70 = scmp.eq.s32.totalorder %s20, 1
      %p71 = por %p69, %p70
      %p72 = scmp.ne.s32.totalorder %s63, %s64
      %p73 = scmp.eq.s32.totalorder %s20, 0
      %p74 = por %p72, %p73
      %p75 = scmp.ne.s32.totalorder %s63, %s64
      %p76 = scmp.eq.s32.totalorder %s21, 1
      %p77 = por %p75, %p76
      %p79 = scmp.ne.s32.totalorder %s64, %s78
      %p80 = scmp.eq.s32.totalorder %s21, 0
      %p81 = por %p79, %p80
      %s83 = sadd.s32 %s82, 1
      %p86 = scmp.eq.s32.totalorder %s15, 1
      %p87 = scmp.ne.s32.totalorder %s82, %s84
      %p88 = scmp.eq.s32.totalorder %s15, 0
      %p89 = por %p87, %p88
      %p90 = scmp.ne.s32.totalorder %s82, %s84
      %p91 = scmp.eq.s32.totalorder %s20, 1
      %p92 = por %p90, %p91
      %p93 = scmp.ne.s32.totalorder %s84, %s85
      %p94 = scmp.eq.s32.totalorder %s20, 0
      %p95 = por %p93, %p94
      %p96 = scmp.ne.s32.totalorder %s84, %s85
      %p97 = scmp.eq.s32.totalorder %s21, 1
      %p98 = por %p96, %p97
      %p100 = scmp.ne.s32.totalorder %s85, %s99
      %p101 = scmp.eq.s32.totalorder %s21, 0
      %p102 = por %p100, %p101
      %s103 = sadd.s32 %s23, %s22
      %s104 = sadd.s32 %s30, %s34
      %s105 = ssub.s32 %s103, %s104
      %p106 = scmp.eq.s32.totalorder %s105, 0
      %s108 = sadd.s32 %s107, 1
      %s109 = scalar_select %p106, %s107, %s108
      %p112 = pneg %p106
      %p113 = scmp.eq.s32.totalorder %s15, 1
      %p114 = por %p112, %p113
      %p115 = scmp.ne.s32.totalorder %s107, %s110
      %p116 = scmp.eq.s32.totalorder %s15, 0
      %p117 = por %p115, %p116
      %p118 = scmp.ne.s32.totalorder %s107, %s110
      %p119 = scmp.eq.s32.totalorder %s20, 1
      %p120 = por %p118, %p119
      %p121 = scmp.ne.s32.totalorder %s110, %s111
      %p122 = scmp.eq.s32.totalorder %s20, 0
      %p123 = por %p121, %p122
      %p124 = scmp.ne.s32.totalorder %s110, %s111
      %p125 = scmp.eq.s32.totalorder %s21, 1
      %p126 = por %p124, %p125
      %p128 = scmp.ne.s32.totalorder %s111, %s127
      %p129 = scmp.eq.s32.totalorder %s21, 0
      %p130 = por %p128, %p129
      %p131 = scmp.le.s32.totalorder 1, %s15
      %p132 = scmp.lt.s32.totalorder %s15, 3
      %p133 = pnand %p131, %p132
      %p134 = pneg %p133
      // Predicated region
      $region9: #{tpu_custom_call.1} parent=5 // pred_check
        _
      $region10: #{tpu_custom_call.1} parent=5 // pred_check_branch
        %136 = sbr.rel (%p133) target = $region12
      $region11: #{tpu_custom_call.1} parent=5 // pred_region
        %s137 = ssub.s32 %s15, 1
        // Predicated region
        $region13: #{tpu_custom_call.1} parent=11 // pred_check
          %p138 = pneg %p53
        $region14: #{tpu_custom_call.1} parent=11 // pred_check_branch
          %140 = sbr.rel (%p138) target = $region16
        $region15: #{tpu_custom_call.1} parent=11 // pred_region
          %s141 = smul.u32 2, %s24
          %s143 = ssub.s32 256, 256
          %144 = vsyncadd [#allocation3], %s143
          %s145 = smul.addr %s141, 4
          %s146 = smul.addr %s145, 32
          %s147 = scalar_lea.hbm %s0, %s146
          %s148 = sshll.u32 [#allocation2], 4
          %s149 = int_to_ptr.vmem [resolvable:$true] %s148
          %154 = dma.hbm_to_vmem [thread:$0]  %s147, 256, %s149, [#allocation3], 32, 32, 2
        $region16: #{tpu_custom_call.1} parent=11 // pred_fallthru
          _
        // Predicated region
        $region17: #{tpu_custom_call.1} parent=11 // pred_check
          %p155 = pneg %p74
        $region18: #{tpu_custom_call.1} parent=11 // pred_check_branch
          %157 = sbr.rel (%p155) target = $region20
        $region19: #{tpu_custom_call.1} parent=11 // pred_region
          %s159 = ssub.s32 16, 16
          %160 = vsyncadd [#allocation5], %s159
          %s162 = sshll.u32 %s1, 4
          %s163 = int_to_ptr.vmem [resolvable:$true] %s162
          %165 = dma.vmem_to_smem %s163, 16, [#allocation6], [#allocation5]
        $region20: #{tpu_custom_call.1} parent=11 // pred_fallthru
          _
        // Predicated region
        $region21: #{tpu_custom_call.1} parent=11 // pred_check
          %p166 = pneg %p95
        $region22: #{tpu_custom_call.1} parent=11 // pred_check_branch
          %168 = sbr.rel (%p166) target = $region24
        $region23: #{tpu_custom_call.1} parent=11 // pred_region
          %s170 = ssub.s32 16, 16
          %171 = vsyncadd [#allocation8], %s170
          %s173 = sshll.u32 %s2, 4
          %s174 = int_to_ptr.vmem [resolvable:$true] %s173
          %176 = dma.vmem_to_smem %s174, 16, [#allocation7], [#allocation8]
        $region24: #{tpu_custom_call.1} parent=11 // pred_fallthru
          _
      $region12: #{tpu_custom_call.1} parent=5 // pred_fallthru
        _
      %p177 = scmp.lt.s32.totalorder %s15, 2
      // Predicated region
      $region25: #{tpu_custom_call.1} parent=5 // pred_check
        %p178 = pneg %p177
      $region26: #{tpu_custom_call.1} parent=5 // pred_check_branch
        %180 = sbr.rel (%p178) target = $region28
      $region27: #{tpu_custom_call.1} parent=5 // pred_region
        _
      $region28: #{tpu_custom_call.1} parent=5 // pred_fallthru
        _
      %p181 = scmp.le.s32.totalorder 1, %s15
      %p182 = scmp.lt.s32.totalorder %s15, 3
      %p183 = pnand %p181, %p182
      %p184 = pneg %p183
      // Predicated region
      $region29: #{tpu_custom_call.1} parent=5 // pred_check
        _
      $region30: #{tpu_custom_call.1} parent=5 // pred_check_branch
        %186 = sbr.rel (%p183) target = $region32
      $region31: #{tpu_custom_call.1} parent=5 // pred_region
        %s187 = ssub.s32 %s15, 1
        // Predicated region
        $region33: #{tpu_custom_call.1} parent=31 // pred_check
          %p188 = pneg %p53
        $region34: #{tpu_custom_call.1} parent=31 // pred_check_branch
          %190 = sbr.rel (%p188) target = $region36
        $region35: #{tpu_custom_call.1} parent=31 // pred_region
          %191 = dma.done [#allocation3], 256
        $region36: #{tpu_custom_call.1} parent=31 // pred_fallthru
          _
        // Predicated region
        $region37: #{tpu_custom_call.1} parent=31 // pred_check
          %p192 = pneg %p74
        $region38: #{tpu_custom_call.1} parent=31 // pred_check_branch
          %194 = sbr.rel (%p192) target = $region40
        $region39: #{tpu_custom_call.1} parent=31 // pred_region
          %195 = dma.done [#allocation5], 16
        $region40: #{tpu_custom_call.1} parent=31 // pred_fallthru
          _
        // Predicated region
        $region41: #{tpu_custom_call.1} parent=31 // pred_check
          %p196 = pneg %p95
        $region42: #{tpu_custom_call.1} parent=31 // pred_check_branch
          %198 = sbr.rel (%p196) target = $region44
        $region43: #{tpu_custom_call.1} parent=31 // pred_region
          %199 = dma.done [#allocation8], 16
        $region44: #{tpu_custom_call.1} parent=31 // pred_fallthru
          _
        %200 = sfence
        %p201 = pneg %p53
        %p202 = pneg %p50
        %p203 = pneg %p74
        %p204 = pneg %p71
        %p205 = pneg %p95
        %p206 = pneg %p92
        %p207 = pneg %p123
        %p208 = pneg %p120
        %s209 = sand.u32 %s110, 1
        %s210 = scalar_lea.sflag [#allocation4], %s209
        %s211 = sand.u32 %s110, 1
        %s212 = smul.addr %s211, 16
        %s213 = scalar_lea.vmem [#allocation9], %s212
        %s214 = smul.u32 2, %s24
        %s215 = sadd.s32 %s25, %s24
        %s216 = smul.u32 2, %s215
        %v217 = vld [vmem:[#allocation2] sm:$0x3]
        %v218 = vld [vmem:[#allocation2 + $0x8] sm:$0x3]
        %s219 = sld [smem:[#allocation6]]
        %v220 = vstv %s219
        %v221 = vmul.f32 %v217, %v220
        %v222 = vmul.f32 %v218, %v220
        %s223 = sld [smem:[#allocation7]]
        %v224 = vstv %s223
        %v225 = vadd.f32 %v221, %v224
        %v226 = vadd.f32 %v222, %v224
        %227 = vst [vmem:[%s213] sm:$0x3] %v225
        %228 = vst [vmem:[%s213 + $0x8] sm:$0x3] %v226
        %s229 = scalar_lea.vmem [#allocation2], 2
        %v230 = vld [vmem:[%s229] sm:$0x3]
        %v231 = vld [vmem:[%s229 + $0x8] sm:$0x3]
        %s232 = sld [smem:[#allocation6 + $0x1]]
        %v233 = vstv %s232
        %v234 = vmul.f32 %v230, %v233
        %v235 = vmul.f32 %v231, %v233
        %s236 = sld [smem:[#allocation7 + $0x1]]
        %v237 = vstv %s236
        %v238 = vadd.f32 %v234, %v237
        %v239 = vadd.f32 %v235, %v237
        %s240 = scalar_lea.vmem %s213, 2 [#allocation9]
        %241 = vst [vmem:[%s240] sm:$0x3] %v238
        %242 = vst [vmem:[%s240 + $0x8] sm:$0x3] %v239
        %s243 = scalar_lea.vmem [#allocation2], 4
        %v244 = vld [vmem:[%s243] sm:$0x3]
        %v245 = vld [vmem:[%s243 + $0x8] sm:$0x3]
        %s246 = sld [smem:[#allocation6 + $0x2]]
        %v247 = vstv %s246
        %v248 = vmul.f32 %v244, %v247
        %v249 = vmul.f32 %v245, %v247
        %s250 = sld [smem:[#allocation7 + $0x2]]
        %v251 = vstv %s250
        %v252 = vadd.f32 %v248, %v251
        %v253 = vadd.f32 %v249, %v251
        %s254 = scalar_lea.vmem %s213, 4 [#allocation9]
        %255 = vst [vmem:[%s254] sm:$0x3] %v252
        %256 = vst [vmem:[%s254 + $0x8] sm:$0x3] %v253
        %s257 = scalar_lea.vmem [#allocation2], 6
        %v258 = vld [vmem:[%s257] sm:$0x3]
        %v259 = vld [vmem:[%s257 + $0x8] sm:$0x3]
        %s260 = sld [smem:[#allocation6 + $0x3]]
        %v261 = vstv %s260
        %v262 = vmul.f32 %v258, %v261
        %v263 = vmul.f32 %v259, %v261
        %s264 = sld [smem:[#allocation7 + $0x3]]
        %v265 = vstv %s264
        %v266 = vadd.f32 %v262, %v265
        %v267 = vadd.f32 %v263, %v265
        %s268 = scalar_lea.vmem %s213, 6 [#allocation9]
        %269 = vst [vmem:[%s268] sm:$0x3] %v266
        %270 = vst [vmem:[%s268 + $0x8] sm:$0x3] %v267
        %s271 = sand.u32 %s110, 1
        %s272 = scalar_lea.sflag [#allocation4], %s271
        %s273 = sand.u32 %s110, 1
        %s274 = smul.addr %s273, 16
        %s275 = scalar_lea.vmem [#allocation9], %s274
        // Predicated region
        $region45: #{tpu_custom_call.1} parent=31 // pred_check
          %p276 = pneg %p120
        $region46: #{tpu_custom_call.1} parent=31 // pred_check_branch
          %278 = sbr.rel (%p276) target = $region48
        $region47: #{tpu_custom_call.1} parent=31 // pred_region
          %s279 = sadd.s32 %s25, %s24
          %s280 = smul.u32 2, %s279
          %s282 = ssub.s32 256, 256
          %283 = vsyncadd %s272, %s282
          %s284 = smul.addr %s280, 4
          %s285 = smul.addr %s284, 32
          %s286 = scalar_lea.hbm %s3, %s285
          %s287 = sshll.u32 %s275, 4
          %s288 = int_to_ptr.vmem [resolvable:$true] %s287
          %293 = dma.vmem_to_hbm [thread:$0]  %s288, 256, %s286, %s272, 32, 32, 2
        $region48: #{tpu_custom_call.1} parent=31 // pred_fallthru
          _
      $region32: #{tpu_custom_call.1} parent=5 // pred_fallthru
        _
      %p294 = scmp.le.s32.totalorder 2, %s15
      // Predicated region
      $region49: #{tpu_custom_call.1} parent=5 // pred_check
        %p295 = pneg %p294
      $region50: #{tpu_custom_call.1} parent=5 // pred_check_branch
        %297 = sbr.rel (%p295) target = $region52
      $region51: #{tpu_custom_call.1} parent=5 // pred_region
        %s298 = ssub.s32 %s15, 2
        // Predicated region
        $region53: #{tpu_custom_call.1} parent=51 // pred_check
          %p299 = pneg %p126
        $region54: #{tpu_custom_call.1} parent=51 // pred_check_branch
          %301 = sbr.rel (%p299) target = $region56
        $region55: #{tpu_custom_call.1} parent=51 // pred_region
          %s302 = sand.u32 %s111, 1
          %s303 = scalar_lea.sflag [#allocation4], %s302
          %s304 = sand.u32 %s111, 1
          %s305 = smul.addr %s304, 16
          %s306 = scalar_lea.vmem [#allocation9], %s305
          %307 = dma.done %s303, 256
        $region56: #{tpu_custom_call.1} parent=51 // pred_fallthru
          _
      $region52: #{tpu_custom_call.1} parent=5 // pred_fallthru
        _
    $region6: #{tpu_custom_call.1} parent=1 // loop_footer
      %s19 = sadd.s32 1, %s15
    $region7: #{tpu_custom_call.1} parent=1 // loop_footer_branch
      %14 = sbr.rel target = $region3
    $region8: #{tpu_custom_call.1} parent=1 // loop_exit
      _
    %308 = vsyncpa [#allocation3], 1
    %s309 = scalar_lea.sflag [#allocation3], 1
    %310 = vsyncpa %s309, 1
    %311 = vsyncpa [#allocation4], 1
    %s312 = scalar_lea.sflag [#allocation4], 1
    %313 = vsyncpa %s312, 1
    %314 = vsyncpa [#allocation5], 1
    %s315 = scalar_lea.sflag [#allocation5], 1
    %316 = vsyncpa %s315, 1
    %317 = vsyncpa [#allocation8], 1

</llo_original>
